<compile_context>
chip_gen: v6e
topology: v6e:2x2x1
jax: 0.10.0
libtpu: 0.0.40
codegen_flags: <defaults>
</compile_context>

<pallas_src>
import jax
import jax.numpy as jnp
from jax.experimental import pallas as pl
from jax.experimental.pallas import tpu as pltpu


def _cdiv(a, b):
    return (a + b - 1) // b


def _round_up(x, m):
    return ((x + m - 1) // m) * m


def _sublane_multiple(dtype):
    itemsize = jnp.dtype(dtype).itemsize
    if itemsize >= 4:
        return 8
    if itemsize == 2:
        return 16
    return 32


def _vmem_budget_bytes():
    """~80% of this generation's physical VMEM (v5e/v6e 128 MiB, v7x 64 MiB)."""
    try:
        cap = int(pltpu.get_tpu_info().vmem_capacity_bytes)
    except Exception:
        cap = 64 * 1024 * 1024  # conservative fallback (v7x-sized)
    return max(int(cap * 0.8), 32 * 1024 * 1024)


def _balanced_tile(dim, max_tile, align):
    """Largest align-multiple tile <= cap that balances tiles to minimize padding."""
    padded = _round_up(dim, align)
    cap = max(align, (max_tile // align) * align)
    if padded <= cap:
        return padded
    ntiles = _cdiv(dim, cap)
    return _round_up(_cdiv(dim, ntiles), align)


# ----------------------------- kernels ---------------------------------------


def _linear_relu_fused_kernel(x_ref, w_ref, b_ref, o_ref):
    """Single-K-tile path: full contraction in one MXU call, fused bias + ReLU."""
    acc = jnp.dot(x_ref[...], w_ref[...], preferred_element_type=jnp.float32)
    acc = acc + b_ref[...].astype(jnp.float32)
    o_ref[...] = jnp.maximum(acc, 0.0).astype(o_ref.dtype)


def _linear_relu_acc_kernel(x_ref, w_ref, b_ref, o_ref, acc_ref):
    """Multi-K-tile path: f32 VMEM accumulator across the (arbitrary) K axis."""
    k = pl.program_id(2)
    partial = jnp.dot(x_ref[...], w_ref[...], preferred_element_type=jnp.float32)

    @pl.when(k == 0)
    def _():
        acc_ref[...] = partial  # overwrite: no zero-init store needed

    @pl.when(k > 0)
    def _():
        acc_ref[...] += partial

    @pl.when(k == pl.num_programs(2) - 1)
    def _():
        out = acc_ref[...] + b_ref[...].astype(jnp.float32)
        o_ref[...] = jnp.maximum(out, 0.0).astype(o_ref.dtype)


# ----------------------------- wrapper ----------------------------------------


def linear_block_forward(
    x,
    w_t,
    bias,
    *,
    tile_n=512,
    tile_out=1024,
    tile_k=1024,
    compute_dtype=jnp.bfloat16,
    collapse_k=True,
):
    """LinearBlock forward: relu(x @ w_t + bias).

    x:    [N, input_dim]                 (any float dtype; output keeps x.dtype)
    w_t:  [input_dim, output_dim]        (weight stored PRE-transposed at init)
    bias: [output_dim]
    """
    n, input_dim = x.shape
    k_w, output_dim = w_t.shape
    assert k_w == input_dim
    assert bias.shape == (output_dim,)

    out_dtype = x.dtype
    cbytes = jnp.dtype(compute_dtype).itemsize
    obytes = jnp.dtype(out_dtype).itemsize
    sublane = _sublane_multiple(compute_dtype)
    budget = _vmem_budget_bytes()

    # Lane alignment: 256 matches the v6e/v7x 2x256^2 MXU; 128 for small dims.
    k_align = 256 if input_dim > 128 else 128
    o_align = 256 if output_dim > 128 else 128

    # --- N tile: balanced, sublane-aligned, floored at 128 rows to feed the MXU.
    tn_cap = max(sublane, (tile_n // sublane) * sublane)
    tn = _balanced_tile(n, tile_n, sublane)
    tn = max(tn, min(128, tn_cap))

    # --- OUT tile: balanced, MXU-aligned.
    to = _balanced_tile(output_dim, tile_out, o_align)

    def working_set(tn_, tk_, to_, with_acc):
        need = 2 * (tn_ * tk_ + tk_ * to_ + to_) * cbytes   # dbl-buffered x, w, bias
        need += 2 * tn_ * to_ * obytes                      # dbl-buffered out tile
        if with_acc:
            need += tn_ * to_ * 4                           # f32 accumulator scratch
        return need

    # --- K tile: collapse the reduction axis whenever full-K tiles fit VMEM.
    k_full = _round_up(input_dim, k_align)
    single_k = collapse_k and working_set(tn, k_full, to, False) <= int(budget * 0.9)
    if single_k:
        tk = k_full
    else:
        tk = _balanced_tile(input_dim, tile_k, k_align)
        # Shrink the largest tile dim until the working set fits the budget.
        while working_set(tn, tk, to, True) > int(budget * 0.9):
            if to >= max(tk, tn) and to > o_align:
                to = max(o_align, _round_up(to // 2, o_align))
            elif tk >= tn and tk > k_align:
                tk = max(k_align, _round_up(tk // 2, k_align))
            elif tn > sublane:
                tn = max(sublane, _round_up(tn // 2, sublane))
            else:
                break

    n_pad = _round_up(n, tn)
    o_pad = _round_up(output_dim, to)

    # v7x has 2 TensorCores: expose >= 2 parallel grid steps when possible.
    if (n_pad // tn) * (o_pad // to) == 1 and to >= 2 * o_align and (to // 2) % o_align == 0:
        to //= 2
        o_pad = _round_up(output_dim, to)

    k_pad = _round_up(input_dim, tk)

    # --- Cast operands for the MXU and zero-pad so every tile is lane-dense.
    x_c = x.astype(compute_dtype)
    w_c = w_t.astype(compute_dtype)
    if (n_pad, k_pad) != (n, input_dim):
        x_c = jnp.pad(x_c, ((0, n_pad - n), (0, k_pad - input_dim)))
    if (k_pad, o_pad) != (input_dim, output_dim):
        w_c = jnp.pad(w_c, ((0, k_pad - input_dim), (0, o_pad - output_dim)))
    b2d = bias.reshape(1, output_dim).astype(jnp.float32)
    if o_pad != output_dim:
        b2d = jnp.pad(b2d, ((0, 0), (0, o_pad - output_dim)))

    needed = working_set(tn, tk, to, with_acc=not single_k)
    vmem_limit = int(min(budget, max(needed + 4 * 1024 * 1024, 16 * 1024 * 1024)))

    if single_k:
        out = pl.pallas_call(
            _linear_relu_fused_kernel,
            out_shape=jax.ShapeDtypeStruct((n_pad, o_pad), out_dtype),
            grid_spec=pltpu.PrefetchScalarGridSpec(
                num_scalar_prefetch=0,
                grid=(n_pad // tn, o_pad // to),
                in_specs=[
                    pl.BlockSpec((tn, tk), lambda i, j: (i, 0)),   # x
                    pl.BlockSpec((tk, to), lambda i, j: (0, j)),   # w_t
                    pl.BlockSpec((1, to), lambda i, j: (0, j)),    # bias
                ],
                out_specs=pl.BlockSpec((tn, to), lambda i, j: (i, j)),
            ),
            compiler_params=pltpu.CompilerParams(
                dimension_semantics=("parallel", "parallel"),
                vmem_limit_bytes=vmem_limit,
            ),
        )(x_c, w_c, b2d)
    else:
        out = pl.pallas_call(
            _linear_relu_acc_kernel,
            out_shape=jax.ShapeDtypeStruct((n_pad, o_pad), out_dtype),
            grid_spec=pltpu.PrefetchScalarGridSpec(
                num_scalar_prefetch=0,
                grid=(n_pad // tn, o_pad // to, k_pad // tk),
                in_specs=[
                    pl.BlockSpec((tn, tk), lambda i, j, kk: (i, kk)),  # x
                    pl.BlockSpec((tk, to), lambda i, j, kk: (kk, j)),  # w_t
                    pl.BlockSpec((1, to), lambda i, j, kk: (0, j)),    # bias
                ],
                out_specs=pl.BlockSpec((tn, to), lambda i, j, kk: (i, j)),
                scratch_shapes=[pltpu.VMEM((tn, to), jnp.float32)],
            ),
            compiler_params=pltpu.CompilerParams(
                dimension_semantics=("parallel", "parallel", "arbitrary"),
                vmem_limit_bytes=vmem_limit,
            ),
        )(x_c, w_c, b2d)

    # Slice away padding (padded rows/cols are discarded; zeros don't pollute).
    if (n_pad, o_pad) != (n, output_dim):
        out = out[:n, :output_dim]
    return out


def init_linear_params(key, input_dim, output_dim, dtype=jnp.float32):
    """nn.Linear-default init U(-1/sqrt(fan_in), 1/sqrt(fan_in)).

    Weight is returned ALREADY transposed to [input_dim, output_dim] so the
    forward path never pays a per-call transpose.
    """
    k_w, k_b = jax.random.split(key)
    bound = 1.0 / jnp.sqrt(jnp.asarray(input_dim, dtype))
    weight = jax.random.uniform(
        k_w, (output_dim, input_dim), dtype, minval=-bound, maxval=bound
    )
    bias = jax.random.uniform(
        k_b, (output_dim,), dtype, minval=-bound, maxval=bound
    )
    return jnp.asarray(weight.T), bias


if __name__ == "__main__":
    key = jax.random.PRNGKey(0)
    k_x, k_p, k_x2, k_p2 = jax.random.split(key, 4)

    def bf16_ref(x, w_t, bias):
        xb = x.astype(jnp.bfloat16).astype(jnp.float32)
        wb = w_t.astype(jnp.bfloat16).astype(jnp.float32)
        return jnp.maximum(xb @ wb + bias, 0.0)

    # --- Test 1: small shapes consistent with the module (batch=8, 32 -> 64),
    #     default tiles -> single-K fused kernel path.
    batch, input_dim, output_dim = 8, 32, 64
    x = jax.random.normal(k_x, (batch, input_dim), jnp.float32)
    w_t, bias = init_linear_params(k_p, input_dim, output_dim)

    out = jax.block_until_ready(linear_block_forward(x, w_t, bias))
    assert out.shape == (batch, output_dim)
    assert jnp.allclose(out, bf16_ref(x, w_t, bias), atol=1e-3, rtol=1e-3)
    assert jnp.allclose(out, jnp.maximum(x @ w_t + bias, 0.0), atol=5e-2, rtol=5e-2)

    # --- Test 2: non-divisible dims + multi-tile grid + K-accumulator path.
    batch2, in2, out2 = 130, 384, 320
    x2 = jax.random.normal(k_x2, (batch2, in2), jnp.float32)
    w_t2, bias2 = init_linear_params(k_p2, in2, out2)

    out_2 = jax.block_until_ready(
        linear_block_forward(
            x2, w_t2, bias2,
            tile_n=64, tile_out=256, tile_k=256, collapse_k=False,
        )
    )
    assert out_2.shape == (batch2, out2)
    assert jnp.allclose(out_2, bf16_ref(x2, w_t2, bias2), atol=1e-3, rtol=1e-3)
    assert jnp.allclose(out_2, jnp.maximum(x2 @ w_t2 + bias2, 0.0), atol=5e-2, rtol=5e-2)

    print("KERNEL_OK")
</pallas_src>

<mosaic_0001>
module attributes {stable_mosaic.version = 11 : i64} {
  func.func @_linear_relu_fused_kernel(%arg0: i32, %arg1: i32, %arg2: memref<128x128xbf16, #tpu.memory_space<vmem>>, %arg3: memref<128x128xbf16, #tpu.memory_space<vmem>>, %arg4: memref<1x128xf32, #tpu.memory_space<vmem>>, %arg5: memref<128x128xf32, #tpu.memory_space<vmem>>) attributes {dimension_semantics = [#tpu.dimension_semantics<parallel>, #tpu.dimension_semantics<parallel>], iteration_bounds = array<i64: 1, 1>, scalar_prefetch = 0 : i64, scratch_operands = 0 : i64, tpu.core_type = #tpu.core_type<tc>, window_params = [{transform_indices = @transform_0, window_bounds = array<i64: 128, 128>}, {transform_indices = @transform_1, window_bounds = array<i64: 128, 128>}, {transform_indices = @transform_2, window_bounds = array<i64: 1, 128>}, {transform_indices = @transform_3, window_bounds = array<i64: 128, 128>}]} {
    %c0 = arith.constant 0 : index
    %c0_0 = arith.constant 0 : index
    %0 = vector.load %arg2[%c0, %c0_0] : memref<128x128xbf16, #tpu.memory_space<vmem>>, vector<128x128xbf16>
    %c0_1 = arith.constant 0 : index
    %c0_2 = arith.constant 0 : index
    %1 = vector.load %arg3[%c0_1, %c0_2] : memref<128x128xbf16, #tpu.memory_space<vmem>>, vector<128x128xbf16>
    %cst = arith.constant dense<0.000000e+00> : vector<128x128xf32>
    %2 = tpu.matmul %0, %1, %cst {dimension_numbers = #tpu.dot_dimension_numbers<[1], [0], [0], [1], [0, 0, 1, 1], [], []>} : vector<128x128xbf16>, vector<128x128xbf16>, vector<128x128xf32> -> vector<128x128xf32>
    %c0_3 = arith.constant 0 : index
    %c0_4 = arith.constant 0 : index
    %3 = vector.load %arg4[%c0_3, %c0_4] : memref<1x128xf32, #tpu.memory_space<vmem>>, vector<1x128xf32>
    %4 = vector.broadcast %3 : vector<1x128xf32> to vector<128x128xf32>
    %5 = arith.addf %2, %4 : vector<128x128xf32>
    %cst_5 = arith.constant 0.000000e+00 : f32
    %6 = vector.broadcast %cst_5 : f32 to vector<128x128xf32>
    %7 = arith.maximumf %5, %6 : vector<128x128xf32>
    %c0_6 = arith.constant 0 : index
    %c0_7 = arith.constant 0 : index
    %8 = vector.load %arg5[%c0_6, %c0_7] : memref<128x128xf32, #tpu.memory_space<vmem>>, vector<128x128xf32>
    tpu.vector_store %arg5[%c0_6, %c0_7], %7 {strides = array<i32>} : memref<128x128xf32, #tpu.memory_space<vmem>>, vector<128x128xf32>,
    return
  }
  func.func @transform_0(%arg0: i32, %arg1: i32) -> (i32, i32) {
    %c0_i32 = arith.constant 0 : i32
    %c0_i32_0 = arith.constant 0 : i32
    return %arg0, %c0_i32 : i32, i32
  }
  func.func @transform_1(%arg0: i32, %arg1: i32) -> (i32, i32) {
    %c0_i32 = arith.constant 0 : i32
    %c0_i32_0 = arith.constant 0 : i32
    return %c0_i32, %arg1 : i32, i32
  }
  func.func @transform_2(%arg0: i32, %arg1: i32) -> (i32, i32) {
    %c0_i32 = arith.constant 0 : i32
    %c0_i32_0 = arith.constant 0 : i32
    return %c0_i32, %arg1 : i32, i32
  }
  func.func @transform_3(%arg0: i32, %arg1: i32) -> (i32, i32) {
    %c0_i32 = arith.constant 0 : i32
    return %arg0, %arg1 : i32, i32
  }
}

</mosaic_0001>

<llo_original>
// kernel: tpu_custom_call.1
$region0: #{tpu_custom_call.1}
  #allocation0 [shape = 'u32[]', space=smem, size = 0x4, offset = 0x4, fixed_abs, tag = 'smem constant byte address 0x4 - core index']
  #allocation1 [shape = 'u32[144,128]{1,0:T(1,128)}', space=vmem, size = 0x12000, scoped, tag = 'internal scratch']
  %s0 = inlined_call_operand.hbm [shape: bf16[128,128], index: 0, kind: input, shape index: {}]
  %s1 = inlined_call_operand.hbm [shape: bf16[128,128], index: 1, kind: input, shape index: {}]
  %s2 = inlined_call_operand.vmem [shape: f32[1,128], index: 2, kind: input, shape index: {}]
  %s3 = inlined_call_operand.hbm [shape: f32[128,128], index: 3, kind: output, shape index: {}]
  %s4 = sld [smem:[#allocation0]]
  $region30: #{tpu_custom_call.1} parent=0
    _
  %s6 = ssub.s32 1, %s4
  %s7 = scalar_select 0, %s6, %s4
  $region1: #{tpu_custom_call.1} parent=0
    #allocation2 [shape = 'u8[32768]{0}', space=vmem, size = 0x8000, scoped, tag = 'input window, operand 0, single buffered']
    #allocation3 [shape = 's32[1]{0}', space=sflag, size = 0x4, scoped, tag = 'scoped memory for tpu_custom_call.1']
    #allocation4 [shape = 's32[1]{0}', space=sflag, size = 0x4, scoped, tag = 'scoped memory for tpu_custom_call.1']
    #allocation5 [shape = 'u8[32768]{0}', space=vmem, size = 0x8000, scoped, tag = 'input window, operand 1, single buffered']
    #allocation6 [shape = 's32[1]{0}', space=sflag, size = 0x4, scoped, tag = 'scoped memory for tpu_custom_call.1']
    #allocation7 [shape = 'u8[65536]{0}', space=vmem, size = 0x10000, scoped, tag = 'output window, operand 0, single buffered']
    %8 = vsyncpa [#allocation3], 0
    %9 = vsyncpa [#allocation6], 0
    %10 = vsyncpa [#allocation4], 0
    // Predicated region
    $region2: #{tpu_custom_call.1} parent=1 // pred_check
      _
    $region3: #{tpu_custom_call.1} parent=1 // pred_check_branch
      %12 = sbr.rel (0) target = $region5
    $region4: #{tpu_custom_call.1} parent=1 // pred_region
      %s14 = ssub.s32 1024, 1024
      %15 = vsyncadd [#allocation3], %s14
      %s16 = sshll.u32 [#allocation2], 4
      %s17 = int_to_ptr.vmem [resolvable:$true] %s16
      %22 = dma.hbm_to_vmem [thread:$0]  %s0, 1024, %s17, [#allocation3], 64, 64, 4
    $region5: #{tpu_custom_call.1} parent=1 // pred_fallthru
      _
    // Predicated region
    $region6: #{tpu_custom_call.1} parent=1 // pred_check
      _
    $region7: #{tpu_custom_call.1} parent=1 // pred_check_branch
      %24 = sbr.rel (0) target = $region9
    $region8: #{tpu_custom_call.1} parent=1 // pred_region
      %s26 = ssub.s32 1024, 1024
      %27 = vsyncadd [#allocation6], %s26
      %s28 = sshll.u32 [#allocation5], 4
      %s29 = int_to_ptr.vmem [resolvable:$true] %s28
      %34 = dma.hbm_to_vmem [thread:$0]  %s1, 1024, %s29, [#allocation6], 64, 64, 4
    $region9: #{tpu_custom_call.1} parent=1 // pred_fallthru
      _
    // Predicated region
    $region10: #{tpu_custom_call.1} parent=1 // pred_check
      _
    $region11: #{tpu_custom_call.1} parent=1 // pred_check_branch
      %36 = sbr.rel (0) target = $region13
    $region12: #{tpu_custom_call.1} parent=1 // pred_region
      _
    $region13: #{tpu_custom_call.1} parent=1 // pred_fallthru
      _
    // Predicated region
    $region14: #{tpu_custom_call.1} parent=1 // pred_check
      _
    $region15: #{tpu_custom_call.1} parent=1 // pred_check_branch
      %38 = sbr.rel (0) target = $region17
    $region16: #{tpu_custom_call.1} parent=1 // pred_region
      %39 = dma.done [#allocation3], 1024
    $region17: #{tpu_custom_call.1} parent=1 // pred_fallthru
      _
    // Predicated region
    $region18: #{tpu_custom_call.1} parent=1 // pred_check
      _
    $region19: #{tpu_custom_call.1} parent=1 // pred_check_branch
      %41 = sbr.rel (0) target = $region21
    $region20: #{tpu_custom_call.1} parent=1 // pred_region
      %42 = dma.done [#allocation6], 1024
    $region21: #{tpu_custom_call.1} parent=1 // pred_fallthru
      _
    %v44 = vld [vmem:[#allocation2] sm:$0xf]
    %v45 = vld [vmem:[#allocation2 + $0x4] sm:$0xf]
    %v46 = vld [vmem:[#allocation2 + $0x8] sm:$0xf]
    %v47 = vld [vmem:[#allocation2 + $0xc] sm:$0xf]
    %v48 = vld [vmem:[#allocation2 + $0x10] sm:$0xf]
    %v49 = vld [vmem:[#allocation2 + $0x14] sm:$0xf]
    %v50 = vld [vmem:[#allocation2 + $0x18] sm:$0xf]
    %v51 = vld [vmem:[#allocation2 + $0x1c] sm:$0xf]
    %v52 = vld [vmem:[#allocation2 + $0x20] sm:$0xf]
    %v53 = vld [vmem:[#allocation2 + $0x24] sm:$0xf]
    %v54 = vld [vmem:[#allocation2 + $0x28] sm:$0xf]
    %v55 = vld [vmem:[#allocation2 + $0x2c] sm:$0xf]
    %v56 = vld [vmem:[#allocation2 + $0x30] sm:$0xf]
    %v57 = vld [vmem:[#allocation2 + $0x34] sm:$0xf]
    %v58 = vld [vmem:[#allocation2 + $0x38] sm:$0xf]
    %v59 = vld [vmem:[#allocation2 + $0x3c] sm:$0xf]
    %v60 = vld [vmem:[#allocation5] sm:$0xf]
    %v61 = vld [vmem:[#allocation5 + $0x4] sm:$0xf]
    %v62 = vld [vmem:[#allocation5 + $0x8] sm:$0xf]
    %v63 = vld [vmem:[#allocation5 + $0xc] sm:$0xf]
    %v64 = vld [vmem:[#allocation5 + $0x10] sm:$0xf]
    %v65 = vld [vmem:[#allocation5 + $0x14] sm:$0xf]
    %v66 = vld [vmem:[#allocation5 + $0x18] sm:$0xf]
    %v67 = vld [vmem:[#allocation5 + $0x1c] sm:$0xf]
    %v68 = vld [vmem:[#allocation5 + $0x20] sm:$0xf]
    %v69 = vld [vmem:[#allocation5 + $0x24] sm:$0xf]
    %v70 = vld [vmem:[#allocation5 + $0x28] sm:$0xf]
    %v71 = vld [vmem:[#allocation5 + $0x2c] sm:$0xf]
    %v72 = vld [vmem:[#allocation5 + $0x30] sm:$0xf]
    %v73 = vld [vmem:[#allocation5 + $0x34] sm:$0xf]
    %v74 = vld [vmem:[#allocation5 + $0x38] sm:$0xf]
    %v75 = vld [vmem:[#allocation5 + $0x3c] sm:$0xf]
    %v76 = vld [vmem:[%s2] sm:$0x1]
    %v78 = vlaneseq
    %v79 = vshrl.u32 %v78, 7
    %v80 = vsub.s32 0, %v79
    %v81 = vrot.slane %v76, %v80
    %v99 = vunpack.c.l.b16 %v44
    %v100 = vunpack.c.l.b16 %v45
    %v101 = vunpack.c.l.b16 %v46
    %v102 = vunpack.c.l.b16 %v47
    %v103 = vunpack.c.l.b16 %v48
    %v104 = vunpack.c.l.b16 %v49
    %v105 = vunpack.c.l.b16 %v50
    %v106 = vunpack.c.l.b16 %v51
    %v107 = vunpack.c.l.b16 %v52
    %v108 = vunpack.c.l.b16 %v53
    %v109 = vunpack.c.l.b16 %v54
    %v110 = vunpack.c.l.b16 %v55
    %v111 = vunpack.c.l.b16 %v56
    %v112 = vunpack.c.l.b16 %v57
    %v113 = vunpack.c.l.b16 %v58
    %v114 = vunpack.c.l.b16 %v59
    %v115 = vpack.c.b16 %v100, %v99
    %v116 = vpack.c.b16 %v102, %v101
    %v117 = vpack.c.b16 %v104, %v103
    %v118 = vpack.c.b16 %v106, %v105
    %v119 = vpack.c.b16 %v108, %v107
    %v120 = vpack.c.b16 %v110, %v109
    %v121 = vpack.c.b16 %v112, %v111
    %v122 = vpack.c.b16 %v114, %v113
    %v147 = vunpack.c.l.b16 %v60
    %v148 = vunpack.c.l.b16 %v61
    %v149 = vunpack.c.l.b16 %v62
    %v150 = vunpack.c.l.b16 %v63
    %v151 = vunpack.c.l.b16 %v64
    %v152 = vunpack.c.l.b16 %v65
    %v153 = vunpack.c.l.b16 %v66
    %v154 = vunpack.c.l.b16 %v67
    %v155 = vunpack.c.l.b16 %v68
    %v156 = vunpack.c.l.b16 %v69
    %v157 = vunpack.c.l.b16 %v70
    %v158 = vunpack.c.l.b16 %v71
    %v159 = vunpack.c.l.b16 %v72
    %v160 = vunpack.c.l.b16 %v73
    %v161 = vunpack.c.l.b16 %v74
    %v162 = vunpack.c.l.b16 %v75
    %v163 = vpack.c.b16 %v148, %v147
    %v164 = vpack.c.b16 %v150, %v149
    %v165 = vpack.c.b16 %v152, %v151
    %v166 = vpack.c.b16 %v154, %v153
    %v167 = vpack.c.b16 %v156, %v155
    %v168 = vpack.c.b16 %v158, %v157
    %v169 = vpack.c.b16 %v160, %v159
    %v170 = vpack.c.b16 %v162, %v161
    %179 = vmatprep.subr.bf16.mxu0 0
    %180 = vmatpush1.bf16.msra.mxu0 %v170
    %181 = vmatprep.subr.bf16.mxu0 0
    %182 = vmatpush1.bf16.msra.mxu0 %v169
    %183 = vmatprep.subr.bf16.mxu0 0
    %184 = vmatpush1.bf16.msra.mxu0 %v168
    %185 = vmatprep.subr.bf16.mxu0 0
    %186 = vmatpush1.bf16.msra.mxu0 %v167
    %187 = vmatprep.subr.bf16.mxu0 0
    %188 = vmatpush1.bf16.msra.mxu0 %v166
    %189 = vmatprep.subr.bf16.mxu0 0
    %190 = vmatpush1.bf16.msra.mxu0 %v165
    %191 = vmatprep.subr.bf16.mxu0 0
    %192 = vmatpush1.bf16.msra.mxu0 %v164
    %193 = vmatprep.subr.bf16.mxu0 0
    %194 = vmatpush1.bf16.msra.mxu0 %v163
    %195 = vmatprep.subr.bf16.mxu0 0
    %196 = vmatpush2.bf16.msra.mxu0 0
    %197 = vmatprep.subr.bf16.mxu0 0
    %198 = vmatpush2.bf16.msra.mxu0 0
    %199 = vmatprep.subr.bf16.mxu0 0
    %200 = vmatpush2.bf16.msra.mxu0 0
    %201 = vmatprep.subr.bf16.mxu0 0
    %202 = vmatpush2.bf16.msra.mxu0 0
    %203 = vmatprep.subr.bf16.mxu0 0
    %204 = vmatpush2.bf16.msra.mxu0 0
    %205 = vmatprep.subr.bf16.mxu0 0
    %206 = vmatpush2.bf16.msra.mxu0 0
    %207 = vmatprep.subr.bf16.mxu0 0
    %208 = vmatpush2.bf16.msra.mxu0 0
    %209 = vmatprep.subr.bf16.mxu0 0
    %210 = vmatpush2.bf16.msra.mxu0 0
    %211 = vmatprep.mubr.bf16.mxu0 0
    %212 = vmatmul.mubr.bf16.gmra.mxu0 %v115
    %v213 = vpop.f32.mrf.mxu0
    %v214 = vadd.f32 %v81, %v213
    %v215 = vpop.f32.mrf.mxu0
    %v216 = vpop.f32.mrf.mxu0
    %v217 = vadd.f32 %v81, %v216
    %v218 = vpop.f32.mrf.mxu0
    %219 = vmatprep.mubr.bf16.mxu0 0
    %220 = vmatmul.mubr.bf16.gmra.mxu0 %v116
    %v221 = vpop.f32.mrf.mxu0
    %v222 = vadd.f32 %v81, %v221
    %v223 = vpop.f32.mrf.mxu0
    %v224 = vpop.f32.mrf.mxu0
    %v225 = vadd.f32 %v81, %v224
    %v226 = vpop.f32.mrf.mxu0
    %227 = vmatprep.mubr.bf16.mxu0 0
    %228 = vmatmul.mubr.bf16.gmra.mxu0 %v117
    %v229 = vpop.f32.mrf.mxu0
    %v230 = vadd.f32 %v81, %v229
    %v231 = vpop.f32.mrf.mxu0
    %v232 = vpop.f32.mrf.mxu0
    %v233 = vadd.f32 %v81, %v232
    %v234 = vpop.f32.mrf.mxu0
    %235 = vmatprep.mubr.bf16.mxu0 0
    %236 = vmatmul.mubr.bf16.gmra.mxu0 %v118
    %v237 = vpop.f32.mrf.mxu0
    %v238 = vadd.f32 %v81, %v237
    %v239 = vpop.f32.mrf.mxu0
    %v240 = vpop.f32.mrf.mxu0
    %v241 = vadd.f32 %v81, %v240
    %v242 = vpop.f32.mrf.mxu0
    %243 = vmatprep.mubr.bf16.mxu0 0
    %244 = vmatmul.mubr.bf16.gmra.mxu0 %v119
    %v245 = vpop.f32.mrf.mxu0
    %v246 = vadd.f32 %v81, %v245
    %v247 = vpop.f32.mrf.mxu0
    %v248 = vpop.f32.mrf.mxu0
    %v249 = vadd.f32 %v81, %v248
    %v250 = vpop.f32.mrf.mxu0
    %251 = vmatprep.mubr.bf16.mxu0 0
    %252 = vmatmul.mubr.bf16.gmra.mxu0 %v120
    %v253 = vpop.f32.mrf.mxu0
    %v254 = vadd.f32 %v81, %v253
    %v255 = vpop.f32.mrf.mxu0
    %v256 = vpop.f32.mrf.mxu0
    %v257 = vadd.f32 %v81, %v256
    %v258 = vpop.f32.mrf.mxu0
    %259 = vmatprep.mubr.bf16.mxu0 0
    %260 = vmatmul.mubr.bf16.gmra.mxu0 %v121
    %v261 = vpop.f32.mrf.mxu0
    %v262 = vadd.f32 %v81, %v261
    %v263 = vpop.f32.mrf.mxu0
    %v264 = vpop.f32.mrf.mxu0
    %v265 = vadd.f32 %v81, %v264
    %v266 = vpop.f32.mrf.mxu0
    %267 = vmatprep.mubr.bf16.mxu0 0
    %268 = vmatmul.mubr.bf16.gmra.mxu0 %v122
    %v269 = vpop.f32.mrf.mxu0
    %v270 = vadd.f32 %v81, %v269
    %v271 = vpop.f32.mrf.mxu0
    %v272 = vpop.f32.mrf.mxu0
    %v273 = vadd.f32 %v81, %v272
    %v274 = vpop.f32.mrf.mxu0
    %275 = vdwg.mxu0
    %v276 = vmax.f32 %v214, 0.0
    %v277 = vmax.f32 %v217, 0.0
    %v278 = vmax.f32 %v222, 0.0
    %v279 = vmax.f32 %v225, 0.0
    %v280 = vmax.f32 %v230, 0.0
    %v281 = vmax.f32 %v233, 0.0
    %v282 = vmax.f32 %v238, 0.0
    %v283 = vmax.f32 %v241, 0.0
    %v284 = vmax.f32 %v246, 0.0
    %v285 = vmax.f32 %v249, 0.0
    %v286 = vmax.f32 %v254, 0.0
    %v287 = vmax.f32 %v257, 0.0
    %v288 = vmax.f32 %v262, 0.0
    %v289 = vmax.f32 %v265, 0.0
    %v290 = vmax.f32 %v270, 0.0
    %v291 = vmax.f32 %v273, 0.0
    %292 = vst [vmem:[#allocation7] sm:$0xff] %v276
    %293 = vst [vmem:[#allocation7 + $0x8] sm:$0xff] %v277
    %294 = vst [vmem:[#allocation7 + $0x10] sm:$0xff] %v278
    %295 = vst [vmem:[#allocation7 + $0x18] sm:$0xff] %v279
    %296 = vst [vmem:[#allocation7 + $0x20] sm:$0xff] %v280
    %297 = vst [vmem:[#allocation7 + $0x28] sm:$0xff] %v281
    %298 = vst [vmem:[#allocation7 + $0x30] sm:$0xff] %v282
    %299 = vst [vmem:[#allocation7 + $0x38] sm:$0xff] %v283
    %300 = vst [vmem:[#allocation7 + $0x40] sm:$0xff] %v284
    %301 = vst [vmem:[#allocation7 + $0x48] sm:$0xff] %v285
    %302 = vst [vmem:[#allocation7 + $0x50] sm:$0xff] %v286
    %303 = vst [vmem:[#allocation7 + $0x58] sm:$0xff] %v287
    %304 = vst [vmem:[#allocation7 + $0x60] sm:$0xff] %v288
    %305 = vst [vmem:[#allocation7 + $0x68] sm:$0xff] %v289
    %306 = vst [vmem:[#allocation7 + $0x70] sm:$0xff] %v290
    %307 = vst [vmem:[#allocation7 + $0x78] sm:$0xff] %v291
    // Predicated region
    $region22: #{tpu_custom_call.1} parent=1 // pred_check
      _
    $region23: #{tpu_custom_call.1} parent=1 // pred_check_branch
      %309 = sbr.rel (0) target = $region25
    $region24: #{tpu_custom_call.1} parent=1 // pred_region
      %s311 = ssub.s32 2048, 2048
      %312 = vsyncadd [#allocation4], %s311
      %s313 = sshll.u32 [#allocation7], 4
      %s314 = int_to_ptr.vmem [resolvable:$true] %s313
      %319 = dma.vmem_to_hbm [thread:$0]  %s314, 2048, %s3, [#allocation4], 128, 128, 8
    $region25: #{tpu_custom_call.1} parent=1 // pred_fallthru
      _
    // Predicated region
    $region26: #{tpu_custom_call.1} parent=1 // pred_check
      _
    $region27: #{tpu_custom_call.1} parent=1 // pred_check_branch
      %321 = sbr.rel (0) target = $region29
    $region28: #{tpu_custom_call.1} parent=1 // pred_region
      %322 = dma.done [#allocation4], 2048
    $region29: #{tpu_custom_call.1} parent=1 // pred_fallthru
      _
    %323 = vsyncpa [#allocation3], 1
    %324 = vsyncpa [#allocation6], 1
    %325 = vsyncpa [#allocation4], 1

</llo_original>
